<compile_context>
chip_gen: v5e
topology: v5e:2x2
jax: 0.10.0
libtpu: 0.0.40
codegen_flags: <defaults>
</compile_context>

<pallas_src>
import functools
import math

import jax
import jax.numpy as jnp
from jax.experimental import pallas as pl
from jax.experimental.pallas import tpu as pltpu


# ---------------------------------------------------------------------------
# Pallas kernels
# ---------------------------------------------------------------------------

def _gemm_bias_kernel(a_ref, b_ref, bias_ref, o_ref, acc_ref):
    """Tiled  O = A @ B + bias  with f32 VMEM accumulator over the K grid axis."""
    k = pl.program_id(2)

    @pl.when(k == 0)
    def _():
        acc_ref[...] = jnp.zeros_like(acc_ref)

    acc_ref[...] += jnp.dot(a_ref[...], b_ref[...],
                            preferred_element_type=jnp.float32)

    @pl.when(k == pl.num_programs(2) - 1)
    def _():
        o_ref[...] = (acc_ref[...] + bias_ref[...]).astype(o_ref.dtype)


def _lstm_recurrence_kernel(xg_ref, whh_ref, hseq_ref, h_scr, c_scr):
    """One timestep per grid iteration; h/c persist in VMEM scratch across steps."""
    t = pl.program_id(0)

    @pl.when(t == 0)
    def _():
        h_scr[...] = jnp.zeros_like(h_scr)
        c_scr[...] = jnp.zeros_like(c_scr)

    hidden = h_scr.shape[1]
    # gates = (x_t @ W_ih^T + b)  [precomputed, f32]  +  h_{t-1} @ W_hh^T  [bf16 MXU]
    gates = xg_ref[0] + jnp.dot(h_scr[...].astype(whh_ref.dtype), whh_ref[...],
                                preferred_element_type=jnp.float32)

    i = jax.nn.sigmoid(gates[:, 0 * hidden:1 * hidden])
    f = jax.nn.sigmoid(gates[:, 1 * hidden:2 * hidden])
    g = jnp.tanh(gates[:, 2 * hidden:3 * hidden])
    o = jax.nn.sigmoid(gates[:, 3 * hidden:4 * hidden])

    c = f * c_scr[...] + i * g
    h = o * jnp.tanh(c)

    c_scr[...] = c
    h_scr[...] = h
    hseq_ref[0] = h.astype(hseq_ref.dtype)


def _fc_softmax_kernel(x_ref, w_ref, b_ref, o_ref):
    """logits = x @ W + b ; softmax over the class dim (PyTorch Softmax(dim=1))."""
    logits = jnp.dot(x_ref[...], w_ref[...],
                     preferred_element_type=jnp.float32) + b_ref[...]
    m = jnp.max(logits, axis=-1, keepdims=True)
    e = jnp.exp(logits - m)
    o_ref[...] = (e / jnp.sum(e, axis=-1, keepdims=True)).astype(o_ref.dtype)


# ---------------------------------------------------------------------------
# Pallas wrappers
# ---------------------------------------------------------------------------

def gemm_bias(a, b_mat, bias):
    """A(M,K) @ B(K,N) + bias(N,), bf16 MXU inputs, f32 accumulate/output."""
    m, k = a.shape
    k2, n = b_mat.shape
    assert k == k2

    a_bf = a.astype(jnp.bfloat16)
    b_bf = b_mat.astype(jnp.bfloat16)
    bias2 = bias.reshape(1, n).astype(jnp.float32)

    tm = m if m <= 256 else 256
    tn = n if n <= 512 else 512
    tk = k if k <= 512 else 512
    assert m % tm == 0 and n % tn == 0 and k % tk == 0
    grid = (m // tm, n // tn, k // tk)

    return pl.pallas_call(
        _gemm_bias_kernel,
        out_shape=jax.ShapeDtypeStruct((m, n), jnp.float32),
        grid_spec=pltpu.PrefetchScalarGridSpec(
            num_scalar_prefetch=0,
            grid=grid,
            in_specs=[pl.BlockSpec((tm, tk), lambda i, j, kk: (i, kk)),
                      pl.BlockSpec((tk, tn), lambda i, j, kk: (kk, j)),
                      pl.BlockSpec((1, tn), lambda i, j, kk: (0, j))],
            out_specs=pl.BlockSpec((tm, tn), lambda i, j, kk: (i, j)),
            scratch_shapes=[pltpu.VMEM((tm, tn), jnp.float32)]),
        compiler_params=pltpu.CompilerParams(
            dimension_semantics=("parallel", "parallel", "arbitrary")),
    )(a_bf, b_bf, bias2)


def lstm_recurrence(xg_tbg, w_hh_t, hidden):
    """xg_tbg: (T, B, 4H) precomputed input projections; w_hh_t: (H, 4H) bf16."""
    t, b, g = xg_tbg.shape
    assert g == 4 * hidden
    return pl.pallas_call(
        _lstm_recurrence_kernel,
        out_shape=jax.ShapeDtypeStruct((t, b, hidden), jnp.float32),
        grid_spec=pltpu.PrefetchScalarGridSpec(
            num_scalar_prefetch=0,
            grid=(t,),
            in_specs=[pl.BlockSpec((1, b, g), lambda tt: (tt, 0, 0)),
                      pl.BlockSpec((hidden, g), lambda tt: (0, 0))],
            out_specs=pl.BlockSpec((1, b, hidden), lambda tt: (tt, 0, 0)),
            scratch_shapes=[pltpu.VMEM((b, hidden), jnp.float32),
                            pltpu.VMEM((b, hidden), jnp.float32)]),
        compiler_params=pltpu.CompilerParams(
            dimension_semantics=("arbitrary",)),  # sequential time loop
    )(xg_tbg.astype(jnp.float32), w_hh_t.astype(jnp.bfloat16))


def fc_softmax(x, w_mat, bias):
    """Tiny fused classifier head: (B,256) @ (256,7) + b, then softmax."""
    b, k = x.shape
    n = w_mat.shape[1]
    return pl.pallas_call(
        _fc_softmax_kernel,
        out_shape=jax.ShapeDtypeStruct((b, n), jnp.float32),
        grid=(1,),
        in_specs=[pl.BlockSpec((b, k), lambda i: (0, 0)),
                  pl.BlockSpec((k, n), lambda i: (0, 0)),
                  pl.BlockSpec((1, n), lambda i: (0, 0))],
        out_specs=pl.BlockSpec((b, n), lambda i: (0, 0)),
    )(x.astype(jnp.float32), w_mat.astype(jnp.float32),
      bias.reshape(1, n).astype(jnp.float32))


# ---------------------------------------------------------------------------
# Full forward pass
# ---------------------------------------------------------------------------

def _lstm_layer(x_tbd, layer_params):
    """x_tbd: (T, B, D) -> (T, B, H) hidden sequence (zero initial h/c)."""
    t, b, d = x_tbd.shape
    w_ih = layer_params['w_ih']                       # (4H, D)
    w_hh = layer_params['w_hh']                       # (4H, H)
    bias = layer_params['b_ih'] + layer_params['b_hh']
    hidden = w_hh.shape[1]
    # Batched input projection for all timesteps at once (tiled Pallas GEMM).
    xg = gemm_bias(x_tbd.reshape(t * b, d), jnp.transpose(w_ih), bias)
    xg = xg.reshape(t, b, 4 * hidden)
    # Sequential recurrence.
    return lstm_recurrence(xg, jnp.transpose(w_hh), hidden)


def lstm_pytorch_forward(x, params):
    """x: (B, T, 512) batch_first, like the PyTorch module."""
    b, t, d = x.shape
    x_tb = jnp.transpose(x, (1, 0, 2)).astype(jnp.float32)   # (T, B, D)
    h1 = _lstm_layer(x_tb, params['lstm1'])                   # (T, B, 512)
    h2 = _lstm_layer(h1, params['lstm2'])                     # (T, B, 256)
    last = h2[t - 1]                                          # (B, 256) == x[:, -1, :]
    return fc_softmax(last, jnp.transpose(params['fc']['w']), params['fc']['b'])


# ---------------------------------------------------------------------------
# Pure-JAX reference (correctness check)
# ---------------------------------------------------------------------------

def _lstm_ref(x_tbd, w_ih, w_hh, bias):
    hidden = w_hh.shape[1]
    b = x_tbd.shape[1]

    def step(carry, xt):
        h, c = carry
        gates = xt @ w_ih.T + h @ w_hh.T + bias
        i = jax.nn.sigmoid(gates[:, :hidden])
        f = jax.nn.sigmoid(gates[:, hidden:2 * hidden])
        g = jnp.tanh(gates[:, 2 * hidden:3 * hidden])
        o = jax.nn.sigmoid(gates[:, 3 * hidden:])
        c = f * c + i * g
        h = o * jnp.tanh(c)
        return (h, c), h

    init = (jnp.zeros((b, hidden), jnp.float32), jnp.zeros((b, hidden), jnp.float32))
    _, hs = jax.lax.scan(step, init, x_tbd)
    return hs


def reference_forward(x, params):
    x_tb = jnp.transpose(x, (1, 0, 2)).astype(jnp.float32)
    p1, p2 = params['lstm1'], params['lstm2']
    h1 = _lstm_ref(x_tb, p1['w_ih'], p1['w_hh'], p1['b_ih'] + p1['b_hh'])
    h2 = _lstm_ref(h1, p2['w_ih'], p2['w_hh'], p2['b_ih'] + p2['b_hh'])
    logits = h2[-1] @ params['fc']['w'].T + params['fc']['b']
    return jax.nn.softmax(logits, axis=1)


# ---------------------------------------------------------------------------
# Deterministic parameter init (PyTorch-style uniform(-1/sqrt(H), 1/sqrt(H)))
# ---------------------------------------------------------------------------

def init_params(key):
    d_in, h1, h2, n_cls = 512, 512, 256, 7

    def uni(k, shape, bound):
        return jax.random.uniform(k, shape, jnp.float32, -bound, bound)

    ks = jax.random.split(key, 10)
    s1, s2, sf = 1.0 / math.sqrt(h1), 1.0 / math.sqrt(h2), 1.0 / math.sqrt(h2)
    return {
        'lstm1': {'w_ih': uni(ks[0], (4 * h1, d_in), s1),
                  'w_hh': uni(ks[1], (4 * h1, h1), s1),
                  'b_ih': uni(ks[2], (4 * h1,), s1),
                  'b_hh': uni(ks[3], (4 * h1,), s1)},
        'lstm2': {'w_ih': uni(ks[4], (4 * h2, h1), s2),
                  'w_hh': uni(ks[5], (4 * h2, h2), s2),
                  'b_ih': uni(ks[6], (4 * h2,), s2),
                  'b_hh': uni(ks[7], (4 * h2,), s2)},
        'fc': {'w': uni(ks[8], (n_cls, h2), sf),
               'b': uni(ks[9], (n_cls,), sf)},
    }


if __name__ == "__main__":
    key = jax.random.PRNGKey(0)
    kx, kp = jax.random.split(key)
    B, T, D = 2, 8, 512                       # input_size=512 fixed by the module
    x = jax.random.normal(kx, (B, T, D), jnp.float32)
    params = init_params(kp)

    out = lstm_pytorch_forward(x, params)
    out = jax.block_until_ready(out)

    assert out.shape == (B, 7), out.shape
    assert bool(jnp.all(jnp.isfinite(out)))
    # softmax rows sum to 1
    assert bool(jnp.allclose(jnp.sum(out, axis=1), 1.0, atol=1e-4))
    # matches pure-JAX f32 reference (generous tolerance for bf16 MXU inputs)
    ref = reference_forward(x, params)
    assert bool(jnp.allclose(out, ref, atol=5e-2)), (out, ref)

    print("KERNEL_OK")
</pallas_src>

<mosaic_0001>
module attributes {stable_mosaic.version = 11 : i64} {
  func.func @_gemm_bias_kernel(%arg0: i32, %arg1: i32, %arg2: i32, %arg3: memref<16x512xbf16, #tpu.memory_space<vmem>>, %arg4: memref<512x512xbf16, #tpu.memory_space<vmem>>, %arg5: memref<1x512xf32, #tpu.memory_space<vmem>>, %arg6: memref<16x512xf32, #tpu.memory_space<vmem>>, %arg7: memref<16x512xf32, #tpu.memory_space<vmem>>) attributes {dimension_semantics = [#tpu.dimension_semantics<parallel>, #tpu.dimension_semantics<parallel>, #tpu.dimension_semantics<arbitrary>], iteration_bounds = array<i64: 1, 4, 1>, scalar_prefetch = 0 : i64, scratch_operands = 1 : i64, tpu.core_type = #tpu.core_type<tc>, window_params = [{transform_indices = @transform_0, window_bounds = array<i64: 16, 512>}, {transform_indices = @transform_1, window_bounds = array<i64: 512, 512>}, {transform_indices = @transform_2, window_bounds = array<i64: 1, 512>}, {transform_indices = @transform_3, window_bounds = array<i64: 16, 512>}]} {
    %c0_i32 = arith.constant 0 : i32
    %0 = arith.cmpi eq, %arg2, %c0_i32 : i32
    %1 = arith.extui %0 : i1 to i32
    %c0_i32_0 = arith.constant 0 : i32
    %2 = arith.cmpi ne, %1, %c0_i32_0 : i32
    scf.if %2 {
      %cst_10 = arith.constant 0.000000e+00 : f32
      %12 = vector.broadcast %cst_10 : f32 to vector<16x512xf32>
      %c0_11 = arith.constant 0 : index
      %c0_12 = arith.constant 0 : index
      %13 = vector.load %arg7[%c0_11, %c0_12] : memref<16x512xf32, #tpu.memory_space<vmem>>, vector<16x512xf32>
      tpu.vector_store %arg7[%c0_11, %c0_12], %12 {strides = array<i32>} : memref<16x512xf32, #tpu.memory_space<vmem>>, vector<16x512xf32>,
    } else {
    }
    %c0 = arith.constant 0 : index
    %c0_1 = arith.constant 0 : index
    %3 = vector.load %arg7[%c0, %c0_1] : memref<16x512xf32, #tpu.memory_space<vmem>>, vector<16x512xf32>
    %c0_2 = arith.constant 0 : index
    %c0_3 = arith.constant 0 : index
    %4 = vector.load %arg3[%c0_2, %c0_3] : memref<16x512xbf16, #tpu.memory_space<vmem>>, vector<16x512xbf16>
    %c0_4 = arith.constant 0 : index
    %c0_5 = arith.constant 0 : index
    %5 = vector.load %arg4[%c0_4, %c0_5] : memref<512x512xbf16, #tpu.memory_space<vmem>>, vector<512x512xbf16>
    %cst = arith.constant dense<0.000000e+00> : vector<16x512xf32>
    %6 = tpu.matmul %4, %5, %cst {dimension_numbers = #tpu.dot_dimension_numbers<[1], [0], [0], [1], [0, 0, 1, 1], [], []>} : vector<16x512xbf16>, vector<512x512xbf16>, vector<16x512xf32> -> vector<16x512xf32>
    %7 = arith.addf %3, %6 : vector<16x512xf32>
    %c0_6 = arith.constant 0 : index
    %c0_7 = arith.constant 0 : index
    %8 = vector.load %arg7[%c0_6, %c0_7] : memref<16x512xf32, #tpu.memory_space<vmem>>, vector<16x512xf32>
    tpu.vector_store %arg7[%c0_6, %c0_7], %7 {strides = array<i32>} : memref<16x512xf32, #tpu.memory_space<vmem>>, vector<16x512xf32>,
    %c0_i32_8 = arith.constant 0 : i32
    %9 = arith.cmpi eq, %arg2, %c0_i32_8 : i32
    %10 = arith.extui %9 : i1 to i32
    %c0_i32_9 = arith.constant 0 : i32
    %11 = arith.cmpi ne, %10, %c0_i32_9 : i32
    scf.if %11 {
      %c0_10 = arith.constant 0 : index
      %c0_11 = arith.constant 0 : index
      %12 = vector.load %arg7[%c0_10, %c0_11] : memref<16x512xf32, #tpu.memory_space<vmem>>, vector<16x512xf32>
      %c0_12 = arith.constant 0 : index
      %c0_13 = arith.constant 0 : index
      %13 = vector.load %arg5[%c0_12, %c0_13] : memref<1x512xf32, #tpu.memory_space<vmem>>, vector<1x512xf32>
      %14 = vector.broadcast %13 : vector<1x512xf32> to vector<16x512xf32>
      %15 = arith.addf %12, %14 : vector<16x512xf32>
      %c0_14 = arith.constant 0 : index
      %c0_15 = arith.constant 0 : index
      %16 = vector.load %arg6[%c0_14, %c0_15] : memref<16x512xf32, #tpu.memory_space<vmem>>, vector<16x512xf32>
      tpu.vector_store %arg6[%c0_14, %c0_15], %15 {strides = array<i32>} : memref<16x512xf32, #tpu.memory_space<vmem>>, vector<16x512xf32>,
    } else {
    }
    return
  }
  func.func @transform_0(%arg0: i32, %arg1: i32, %arg2: i32) -> (i32, i32) {
    %c0_i32 = arith.constant 0 : i32
    return %arg0, %arg2 : i32, i32
  }
  func.func @transform_1(%arg0: i32, %arg1: i32, %arg2: i32) -> (i32, i32) {
    %c0_i32 = arith.constant 0 : i32
    return %arg2, %arg1 : i32, i32
  }
  func.func @transform_2(%arg0: i32, %arg1: i32, %arg2: i32) -> (i32, i32) {
    %c0_i32 = arith.constant 0 : i32
    %c0_i32_0 = arith.constant 0 : i32
    return %c0_i32, %arg1 : i32, i32
  }
  func.func @transform_3(%arg0: i32, %arg1: i32, %arg2: i32) -> (i32, i32) {
    %c0_i32 = arith.constant 0 : i32
    return %arg0, %arg1 : i32, i32
  }
}

</mosaic_0001>

<llo_original>
// kernel: tpu_custom_call.1
$region0: #{tpu_custom_call.1}
  #allocation0 [shape = 'u32[]', space=smem, size = 0x4, offset = 0x4, fixed_abs, tag = 'smem constant byte address 0x4 - core index']
  #allocation1 [shape = 'u32[72,128]{1,0:T(1,128)}', space=vmem, size = 0x9000, scoped, tag = 'internal scratch']
  #allocation2 [shape = 'f32[16,512]{1,0:T(8,128)}', space=vmem, size = 0x8000, scoped, tag = 'scratch operand']
  %s0 = inlined_call_operand.hbm [shape: bf16[16,512], index: 0, kind: input, shape index: {}]
  %s1 = inlined_call_operand.hbm [shape: bf16[512,2048], index: 1, kind: input, shape index: {}]
  %s2 = inlined_call_operand.hbm [shape: f32[1,2048], index: 2, kind: input, shape index: {}]
  %s3 = inlined_call_operand.hbm [shape: f32[16,2048], index: 3, kind: output, shape index: {}]
  %s4 = sld [smem:[#allocation0]]
  $region65: #{tpu_custom_call.1} parent=0
    _
  %s6 = ssub.s32 1, %s4
  %s7 = scalar_select 0, %s6, %s4
  $region1: #{tpu_custom_call.1} parent=0
    #allocation3 [shape = 'u8[16384]{0}', space=vmem, size = 0x4000, scoped, tag = 'input window, operand 0, single buffered']
    #allocation4 [shape = 's32[2]{0}', space=sflag, size = 0x8, scoped, tag = 'scoped memory for tpu_custom_call.1']
    #allocation5 [shape = 's32[2]{0}', space=sflag, size = 0x8, scoped, tag = 'scoped memory for tpu_custom_call.1']
    #allocation6 [shape = 'u8[1048576]{0}', space=vmem, size = 0x100000, scoped, tag = 'input window, operand 1']
    #allocation7 [shape = 's32[2]{0}', space=sflag, size = 0x8, scoped, tag = 'scoped memory for tpu_custom_call.1']
    #allocation8 [shape = 'u8[4096]{0}', space=vmem, size = 0x1000, scoped, tag = 'input window, operand 2']
    #allocation9 [shape = 'u8[65536]{0}', space=vmem, size = 0x10000, scoped, tag = 'output window, operand 0']
    %8 = vsyncpa [#allocation4], 0
    %9 = vsyncpa [#allocation7], 0
    %s10 = scalar_lea.sflag [#allocation7], 1
    %11 = vsyncpa %s10, 0
    %12 = vsyncpa [#allocation5], 0
    %s13 = scalar_lea.sflag [#allocation5], 1
    %14 = vsyncpa %s13, 0
    loop: start=0, step=1, limit=6
    $region2: #{tpu_custom_call.1} parent=1 // loop_pre_header
      _
    $region3: #{tpu_custom_call.1} parent=1 // loop_header
      %s16 = sphi 0, %s20
      %p17 = scmp.ge.s32.totalorder %s16, 6
      %s23 = sphi 0, %s42
      %s24 = sphi 0, %s38
      %s25 = sphi 0, %s34
      %s26 = sphi 0, %s23
      %s27 = sphi 0, %s24
      %s28 = sphi 0, %s25
      %s29 = sphi 0, %s26
      %s30 = sphi 0, %s27
      %s31 = sphi 0, %s28
      %s47 = sphi 0, %s49
      %s50 = sphi 0, %s47
      %s51 = sphi 0, %s50
      %s67 = sphi 0, %s51
      %s75 = sphi 0, %s77
      %s78 = sphi 0, %s75
      %s79 = sphi 0, %s78
      %s95 = sphi 0, %s79
      %s101 = sphi 0, %s103
      %s104 = sphi 0, %s101
      %s105 = sphi 0, %s104
      %s121 = sphi 0, %s105
      %s129 = sphi 0, %s131
      %s132 = sphi 0, %s129
      %s133 = sphi 0, %s132
      %s149 = sphi 0, %s133
    $region4: #{tpu_custom_call.1} parent=1 // loop_header_branch
      %19 = sbr.rel (%p17) target = $region8
    $region5: #{tpu_custom_call.1} parent=1 // loop_body
      %s21 = ssub.s32 %s16, 1
      %s22 = ssub.s32 %s16, 2
      %s32 = sadd.s32 1, %s25
      %p33 = scmp.ge.s32.totalorder %s32, 1
      %s34 = scalar_select %p33, 0, %s32
      %s35 = sadd.s32 1, %s24
      %s36 = scalar_select %p33, %s35, %s24
      %p37 = scmp.ge.s32.totalorder %s36, 4
      %s38 = scalar_select %p37, 0, %s36
      %s39 = sadd.s32 1, %s23
      %s40 = scalar_select %p37, %s39, %s23
      %p41 = scmp.ge.s32.totalorder %s40, 1
      %s42 = scalar_select %p41, 0, %s40
      %s43 = ssub.s32 %s23, %s42
      %s44 = ssub.s32 %s25, %s34
      %s45 = sor.u32 %s43, %s44
      %p46 = scmp.eq.s32.totalorder %s45, 0
      %s48 = sadd.s32 %s47, 1
      %s49 = scalar_select %p46, %s47, %s48
      %p52 = pneg %p46
      %p53 = scmp.eq.s32.totalorder %s16, 3
      %p54 = por %p52, %p53
      %p55 = scmp.ne.s32.totalorder %s47, %s50
      %p56 = scmp.eq.s32.totalorder %s16, 0
      %p57 = por %p55, %p56
      %p58 = scmp.ne.s32.totalorder %s47, %s50
      %p59 = scmp.eq.s32.totalorder %s21, 3
      %p60 = por %p58, %p59
      %p61 = scmp.ne.s32.totalorder %s50, %s51
      %p62 = scmp.eq.s32.totalorder %s21, 0
      %p63 = por %p61, %p62
      %p64 = scmp.ne.s32.totalorder %s50, %s51
      %p65 = scmp.eq.s32.totalorder %s22, 3
      %p66 = por %p64, %p65
      %p68 = scmp.ne.s32.totalorder %s51, %s67
      %p69 = scmp.eq.s32.totalorder %s22, 0
      %p70 = por %p68, %p69
      %s71 = ssub.s32 %s25, %s34
      %s72 = ssub.s32 %s24, %s38
      %s73 = sor.u32 %s71, %s72
      %p74 = scmp.eq.s32.totalorder %s73, 0
      %s76 = sadd.s32 %s75, 1
      %s77 = scalar_select %p74, %s75, %s76
      %p80 = pneg %p74
      %p81 = scmp.eq.s32.totalorder %s16, 3
      %p82 = por %p80, %p81
      %p83 = scmp.ne.s32.totalorder %s75, %s78
      %p84 = scmp.eq.s32.totalorder %s16, 0
      %p85 = por %p83, %p84
      %p86 = scmp.ne.s32.totalorder %s75, %s78
      %p87 = scmp.eq.s32.totalorder %s21, 3
      %p88 = por %p86, %p87
      %p89 = scmp.ne.s32.totalorder %s78, %s79
      %p90 = scmp.eq.s32.totalorder %s21, 0
      %p91 = por %p89, %p90
      %p92 = scmp.ne.s32.totalorder %s78, %s79
      %p93 = scmp.eq.s32.totalorder %s22, 3
      %p94 = por %p92, %p93
      %p96 = scmp.ne.s32.totalorder %s79, %s95
      %p97 = scmp.eq.s32.totalorder %s22, 0
      %p98 = por %p96, %p97
      %s99 = ssub.s32 %s24, %s38
      %p100 = scmp.eq.s32.totalorder %s99, 0
      %s102 = sadd.s32 %s101, 1
      %s103 = scalar_select %p100, %s101, %s102
      %p106 = pneg %p100
      %p107 = scmp.eq.s32.totalorder %s16, 3
      %p108 = por %p106, %p107
      %p109 = scmp.ne.s32.totalorder %s101, %s104
      %p110 = scmp.eq.s32.totalorder %s16, 0
      %p111 = por %p109, %p110
      %p112 = scmp.ne.s32.totalorder %s101, %s104
      %p113 = scmp.eq.s32.totalorder %s21, 3
      %p114 = por %p112, %p113
      %p115 = scmp.ne.s32.totalorder %s104, %s105
      %p116 = scmp.eq.s32.totalorder %s21, 0
      %p117 = por %p115, %p116
      %p118 = scmp.ne.s32.totalorder %s104, %s105
      %p119 = scmp.eq.s32.totalorder %s22, 3
      %p120 = por %p118, %p119
      %p122 = scmp.ne.s32.totalorder %s105, %s121
      %p123 = scmp.eq.s32.totalorder %s22, 0
      %p124 = por %p122, %p123
      %s125 = ssub.s32 %s23, %s42
      %s126 = ssub.s32 %s24, %s38
      %s127 = sor.u32 %s125, %s126
      %p128 = scmp.eq.s32.totalorder %s127, 0
      %s130 = sadd.s32 %s129, 1
      %s131 = scalar_select %p128, %s129, %s130
      %p134 = pneg %p128
      %p135 = scmp.eq.s32.totalorder %s16, 3
      %p136 = por %p134, %p135
      %p137 = scmp.ne.s32.totalorder %s129, %s132
      %p138 = scmp.eq.s32.totalorder %s16, 0
      %p139 = por %p137, %p138
      %p140 = scmp.ne.s32.totalorder %s129, %s132
      %p141 = scmp.eq.s32.totalorder %s21, 3
      %p142 = por %p140, %p141
      %p143 = scmp.ne.s32.totalorder %s132, %s133
      %p144 = scmp.eq.s32.totalorder %s21, 0
      %p145 = por %p143, %p144
      %p146 = scmp.ne.s32.totalorder %s132, %s133
      %p147 = scmp.eq.s32.totalorder %s22, 3
      %p148 = por %p146, %p147
      %p150 = scmp.ne.s32.totalorder %s133, %s149
      %p151 = scmp.eq.s32.totalorder %s22, 0
      %p152 = por %p150, %p151
      %p153 = scmp.le.s32.totalorder 1, %s16
      %p154 = scmp.lt.s32.totalorder %s16, 5
      %p155 = pnand %p153, %p154
      %p156 = pneg %p155
      // Predicated region
      $region9: #{tpu_custom_call.1} parent=5 // pred_check
        _
      $region10: #{tpu_custom_call.1} parent=5 // pred_check_branch
        %158 = sbr.rel (%p155) target = $region12
      $region11: #{tpu_custom_call.1} parent=5 // pred_region
        %s159 = ssub.s32 %s16, 1
        // Predicated region
        $region13: #{tpu_custom_call.1} parent=11 // pred_check
          %p160 = pneg %p63
        $region14: #{tpu_custom_call.1} parent=11 // pred_check_branch
          %162 = sbr.rel (%p160) target = $region16
        $region15: #{tpu_custom_call.1} parent=11 // pred_region
          %s163 = smul.u32 2, %s26
          %s164 = smul.u32 4, %s28
          %166 = vsyncadd [#allocation4], 0
          %s167 = smul.addr %s163, 4
          %s168 = sadd.s32 %s164, %s167
          %s169 = smul.addr %s168, 4
          %s170 = scalar_lea.hbm %s0, %s169
          %s171 = sshll.u32 %s170, 4
          %s172 = int_to_ptr.hbm [resolvable:$true] %s171
          %s173 = sshll.u32 [#allocation3], 4
          %s174 = int_to_ptr.vmem [resolvable:$true] %s173
          %179 = dma.hbm_to_vmem [thread:$0]  %s172, 512, %s174, [#allocation4], 256, 256, 16
        $region16: #{tpu_custom_call.1} parent=11 // pred_fallthru
          _
      $region12: #{tpu_custom_call.1} parent=5 // pred_fallthru
        _
      %p180 = scmp.lt.s32.totalorder %s16, 4
      // Predicated region
      $region17: #{tpu_custom_call.1} parent=5 // pred_check
        %p181 = pneg %p180
      $region18: #{tpu_custom_call.1} parent=5 // pred_check_branch
        %183 = sbr.rel (%p181) target = $region20
      $region19: #{tpu_custom_call.1} parent=5 // pred_region
        // Predicated region
        $region21: #{tpu_custom_call.1} parent=19 // pred_check
          %p184 = pneg %p85
        $region22: #{tpu_custom_call.1} parent=19 // pred_check_branch
          %186 = sbr.rel (%p184) target = $region24
        $region23: #{tpu_custom_call.1} parent=19 // pred_region
          %s187 = sand.u32 %s16, 1
          %s188 = scalar_lea.sflag [#allocation7], %s187
          %s189 = sand.u32 %s75, 1
          %s190 = smul.addr %s189, 1024
          %s191 = scalar_lea.vmem [#allocation6], %s190
          %s192 = smul.u32 64, %s25
          %s193 = smul.u32 4, %s24
          %195 = vsyncadd %s188, 0
          %s196 = smul.addr %s192, 16
          %s197 = sadd.s32 %s193, %s196
          %s198 = smul.addr %s197, 4
          %s199 = scalar_lea.hbm %s1, %s198
          %s200 = sshll.u32 %s199, 4
          %s201 = int_to_ptr.hbm [resolvable:$true] %s200
          %s202 = sshll.u32 %s191, 4
          %s203 = int_to_ptr.vmem [resolvable:$true] %s202
          %208 = dma.hbm_to_vmem [thread:$0]  %s201, 16384, %s203, %s188, 1024, 256, 16
        $region24: #{tpu_custom_call.1} parent=19 // pred_fallthru
          _
        // Predicated region
        $region25: #{tpu_custom_call.1} parent=19 // pred_check
          %p209 = pneg %p111
        $region26: #{tpu_custom_call.1} parent=19 // pred_check_branch
          %211 = sbr.rel (%p209) target = $region28
        $region27: #{tpu_custom_call.1} parent=19 // pred_region
          %s212 = sand.u32 %s16, 1
          %s213 = scalar_lea.sflag [#allocation7], %s212
          %s214 = sand.u32 %s101, 1
          %s215 = smul.addr %s214, 4
          %s216 = scalar_lea.vmem [#allocation8], %s215
          %s217 = smul.u32 4, %s24
          %219 = vsyncadd %s213, 0
          %s220 = scalar_lea.hbm %s2, %s217
          %s222 = sshll.u32 %s220, 4
          %s223 = int_to_ptr.hbm [resolvable:$true] %s222
          %s224 = sshll.u32 %s216, 4
          %s225 = int_to_ptr.vmem [resolvable:$true] %s224
          %227 = dma.hbm_to_vmem [thread:$0]  %s223, 64, %s225, %s213
        $region28: #{tpu_custom_call.1} parent=19 // pred_fallthru
          _
      $region20: #{tpu_custom_call.1} parent=5 // pred_fallthru
        _
      %p228 = scmp.le.s32.totalorder 1, %s16
      %p229 = scmp.lt.s32.totalorder %s16, 5
      %p230 = pnand %p228, %p229
      %p231 = pneg %p230
      // Predicated region
      $region29: #{tpu_custom_call.1} parent=5 // pred_check
        _
      $region30: #{tpu_custom_call.1} parent=5 // pred_check_branch
        %233 = sbr.rel (%p230) target = $region32
      $region31: #{tpu_custom_call.1} parent=5 // pred_region
        %s234 = ssub.s32 %s16, 1
        // Predicated region
        $region33: #{tpu_custom_call.1} parent=31 // pred_check
          %p235 = pneg %p63
        $region34: #{tpu_custom_call.1} parent=31 // pred_check_branch
          %237 = sbr.rel (%p235) target = $region36
        $region35: #{tpu_custom_call.1} parent=31 // pred_region
          %239 = dma.done [#allocation4], 512
        $region36: #{tpu_custom_call.1} parent=31 // pred_fallthru
          _
        %s240 = sand.u32 %s21, 1
        %s241 = scalar_lea.sflag [#allocation7], %s240
        %s242 = sand.u32 %s78, 1
        %s243 = smul.addr %s242, 1024
        %s244 = scalar_lea.vmem [#allocation6], %s243
        // Predicated region
        $region37: #{tpu_custom_call.1} parent=31 // pred_check
          %p245 = pneg %p91
        $region38: #{tpu_custom_call.1} parent=31 // pred_check_branch
          %247 = sbr.rel (%p245) target = $region40
        $region39: #{tpu_custom_call.1} parent=31 // pred_region
          %249 = dma.done %s241, 16384
        $region40: #{tpu_custom_call.1} parent=31 // pred_fallthru
          _
        %s250 = sand.u32 %s21, 1
        %s251 = scalar_lea.sflag [#allocation7], %s250
        %s252 = sand.u32 %s104, 1
        %s253 = smul.addr %s252, 4
        %s254 = scalar_lea.vmem [#allocation8], %s253
        // Predicated region
        $region41: #{tpu_custom_call.1} parent=31 // pred_check
          %p255 = pneg %p117
        $region42: #{tpu_custom_call.1} parent=31 // pred_check_branch
          %257 = sbr.rel (%p255) target = $region44
        $region43: #{tpu_custom_call.1} parent=31 // pred_region
          %259 = dma.done %s251, 64
        $region44: #{tpu_custom_call.1} parent=31 // pred_fallthru
          _
        %p260 = pneg %p63
        %p261 = pneg %p60
        %s262 = sand.u32 %s21, 1
        %s263 = scalar_lea.sflag [#allocation7], %s262
        %s264 = sand.u32 %s78, 1
        %s265 = smul.addr %s264, 1024
        %s266 = scalar_lea.vmem [#allocation6], %s265
        %p267 = pneg %p91
        %p268 = pneg %p88
        %s269 = sand.u32 %s21, 1
        %s270 = scalar_lea.sflag [#allocation7], %s269
        %s271 = sand.u32 %s104, 1
        %s272 = smul.addr %s271, 4
        %s273 = scalar_lea.vmem [#allocation8], %s272
        %p274 = pneg %p117
        %p275 = pneg %p114
        %p276 = pneg %p145
        %p277 = pneg %p142
        %s278 = sand.u32 %s132, 1
        %s279 = scalar_lea.sflag [#allocation5], %s278
        %s280 = sand.u32 %s132, 1
        %s281 = smul.addr %s280, 64
        %s282 = scalar_lea.vmem [#allocation9], %s281
        %s283 = smul.u32 2, %s26
        %s284 = smul.u32 4, %s28
        %s285 = smul.u32 64, %s28
        %s286 = smul.u32 4, %s27
        %s287 = smul.u32 4, %s27
        %s288 = smul.u32 2, %s26
        %s289 = smul.u32 4, %s27
        %p290 = scmp.eq.s32.totalorder %s28, 0
        // Predicated region
        $region45: #{tpu_custom_call.1} parent=31 // pred_check
          %p291 = pneg %p290
        $region46: #{tpu_custom_call.1} parent=31 // pred_check_branch
          %293 = sbr.rel (%p291) target = $region48
        $region47: #{tpu_custom_call.1} parent=31 // pred_region
          %294 = vst [vmem:[#allocation2] sm:$0xff] 0.0
          %295 = vst [vmem:[#allocation2 + $0x8] sm:$0xff] 0.0
          %296 = vst [vmem:[#allocation2 + $0x10] sm:$0xff] 0.0
          %297 = vst [vmem:[#allocation2 + $0x18] sm:$0xff] 0.0
          %298 = vst [vmem:[#allocation2 + $0x20] sm:$0xff] 0.0
          %299 = vst [vmem:[#allocation2 + $0x28] sm:$0xff] 0.0
          %300 = vst [vmem:[#allocation2 + $0x30] sm:$0xff] 0.0
          %301 = vst [vmem:[#allocation2 + $0x38] sm:$0xff] 0.0
        $region48: #{tpu_custom_call.1} parent=31 // pred_fallthru
          _
        %v302 = vld [vmem:[#allocation2] sm:$0xff]
        %v303 = vld [vmem:[#allocation2 + $0x8] sm:$0xff]
        %v304 = vld [vmem:[#allocation2 + $0x10] sm:$0xff]
        %v305 = vld [vmem:[#allocation2 + $0x18] sm:$0xff]
        %v306 = vld [vmem:[#allocation2 + $0x20] sm:$0xff]
        %v307 = vld [vmem:[#allocation2 + $0x28] sm:$0xff]
        %v308 = vld [vmem:[#allocation2 + $0x30] sm:$0xff]
        %v309 = vld [vmem:[#allocation2 + $0x38] sm:$0xff]
        %v310 = vld [vmem:[#allocation3] sm:$0xff]
        %v311 = vld [vmem:[#allocation3 + $0x8] sm:$0xff]
        %v312 = vld [vmem:[#allocation3 + $0x10] sm:$0xff]
        %v313 = vld [vmem:[#allocation3 + $0x18] sm:$0xff]
        %v314 = vld [vmem:[%s244] sm:$0xff]
        %v315 = vld [vmem:[%s244 + $0x8] sm:$0xff]
        %v316 = vld [vmem:[%s244 + $0x10] sm:$0xff]
        %v317 = vld [vmem:[%s244 + $0x18] sm:$0xff]
        %v318 = vld [vmem:[%s244 + $0x20] sm:$0xff]
        %v319 = vld [vmem:[%s244 + $0x28] sm:$0xff]
        %v320 = vld [vmem:[%s244 + $0x30] sm:$0xff]
        %v321 = vld [vmem:[%s244 + $0x38] sm:$0xff]
        %v322 = vld [vmem:[%s244 + $0x40] sm:$0xff]
        %v323 = vld [vmem:[%s244 + $0x48] sm:$0xff]
        %v324 = vld [vmem:[%s244 + $0x50] sm:$0xff]
        %v325 = vld [vmem:[%s244 + $0x58] sm:$0xff]
        %v326 = vld [vmem:[%s244 + $0x60] sm:$0xff]
        %v327 = vld [vmem:[%s244 + $0x68] sm:$0xff]
        %v328 = vld [vmem:[%s244 + $0x70] sm:$0xff]
        %v329 = vld [vmem:[%s244 + $0x78] sm:$0xff]
        %v330 = vld [vmem:[%s244 + $0x80] sm:$0xff]
        %v331 = vld [vmem:[%s244 + $0x88] sm:$0xff]
        %v332 = vld [vmem:[%s244 + $0x90] sm:$0xff]
        %v333 = vld [vmem:[%s244 + $0x98] sm:$0xff]
        %v334 = vld [vmem:[%s244 + $0xa0] sm:$0xff]
        %v335 = vld [vmem:[%s244 + $0xa8] sm:$0xff]
        %v336 = vld [vmem:[%s244 + $0xb0] sm:$0xff]
        %v337 = vld [vmem:[%s244 + $0xb8] sm:$0xff]
        %v338 = vld [vmem:[%s244 + $0xc0] sm:$0xff]
        %v339 = vld [vmem:[%s244 + $0xc8] sm:$0xff]
        %v340 = vld [vmem:[%s244 + $0xd0] sm:$0xff]
        %v341 = vld [vmem:[%s244 + $0xd8] sm:$0xff]
        %v342 = vld [vmem:[%s244 + $0xe0] sm:$0xff]
        %v343 = vld [vmem:[%s244 + $0xe8] sm:$0xff]
        %v344 = vld [vmem:[%s244 + $0xf0] sm:$0xff]
        %v345 = vld [vmem:[%s244 + $0xf8] sm:$0xff]
        %v346 = vld [vmem:[%s244 + $0x100] sm:$0xff]
        %v347 = vld [vmem:[%s244 + $0x108] sm:$0xff]
        %v348 = vld [vmem:[%s244 + $0x110] sm:$0xff]
        %v349 = vld [vmem:[%s244 + $0x118] sm:$0xff]
        %v350 = vld [vmem:[%s244 + $0x120] sm:$0xff]
        %v351 = vld [vmem:[%s244 + $0x128] sm:$0xff]
        %v352 = vld [vmem:[%s244 + $0x130] sm:$0xff]
        %v353 = vld [vmem:[%s244 + $0x138] sm:$0xff]
        %v354 = vld [vmem:[%s244 + $0x140] sm:$0xff]
        %v355 = vld [vmem:[%s244 + $0x148] sm:$0xff]
        %v356 = vld [vmem:[%s244 + $0x150] sm:$0xff]
        %v357 = vld [vmem:[%s244 + $0x158] sm:$0xff]
        %v358 = vld [vmem:[%s244 + $0x160] sm:$0xff]
        %v359 = vld [vmem:[%s244 + $0x168] sm:$0xff]
        %v360 = vld [vmem:[%s244 + $0x170] sm:$0xff]
        %v361 = vld [vmem:[%s244 + $0x178] sm:$0xff]
        %v362 = vld [vmem:[%s244 + $0x180] sm:$0xff]
        %v363 = vld [vmem:[%s244 + $0x188] sm:$0xff]
        %v364 = vld [vmem:[%s244 + $0x190] sm:$0xff]
        %v365 = vld [vmem:[%s244 + $0x198] sm:$0xff]
        %v366 = vld [vmem:[%s244 + $0x1a0] sm:$0xff]
        %v367 = vld [vmem:[%s244 + $0x1a8] sm:$0xff]
        %v368 = vld [vmem:[%s244 + $0x1b0] sm:$0xff]
        %v369 = vld [vmem:[%s244 + $0x1b8] sm:$0xff]
        %v370 = vld [vmem:[%s244 + $0x1c0] sm:$0xff]
        %v371 = vld [vmem:[%s244 + $0x1c8] sm:$0xff]
        %v372 = vld [vmem:[%s244 + $0x1d0] sm:$0xff]
        %v373 = vld [vmem:[%s244 + $0x1d8] sm:$0xff]
        %v374 = vld [vmem:[%s244 + $0x1e0] sm:$0xff]
        %v375 = vld [vmem:[%s244 + $0x1e8] sm:$0xff]
        %v376 = vld [vmem:[%s244 + $0x1f0] sm:$0xff]
        %v377 = vld [vmem:[%s244 + $0x1f8] sm:$0xff]
        %v378 = vld [vmem:[%s244 + $0x200] sm:$0xff]
        %v379 = vld [vmem:[%s244 + $0x208] sm:$0xff]
        %v380 = vld [vmem:[%s244 + $0x210] sm:$0xff]
        %v381 = vld [vmem:[%s244 + $0x218] sm:$0xff]
        %v382 = vld [vmem:[%s244 + $0x220] sm:$0xff]
        %v383 = vld [vmem:[%s244 + $0x228] sm:$0xff]
        %v384 = vld [vmem:[%s244 + $0x230] sm:$0xff]
        %v385 = vld [vmem:[%s244 + $0x238] sm:$0xff]
        %v386 = vld [vmem:[%s244 + $0x240] sm:$0xff]
        %v387 = vld [vmem:[%s244 + $0x248] sm:$0xff]
        %v388 = vld [vmem:[%s244 + $0x250] sm:$0xff]
        %v389 = vld [vmem:[%s244 + $0x258] sm:$0xff]
        %v390 = vld [vmem:[%s244 + $0x260] sm:$0xff]
        %v391 = vld [vmem:[%s244 + $0x268] sm:$0xff]
        %v392 = vld [vmem:[%s244 + $0x270] sm:$0xff]
        %v393 = vld [vmem:[%s244 + $0x278] sm:$0xff]
        %v394 = vld [vmem:[%s244 + $0x280] sm:$0xff]
        %v395 = vld [vmem:[%s244 + $0x288] sm:$0xff]
        %v396 = vld [vmem:[%s244 + $0x290] sm:$0xff]
        %v397 = vld [vmem:[%s244 + $0x298] sm:$0xff]
        %v398 = vld [vmem:[%s244 + $0x2a0] sm:$0xff]
        %v399 = vld [vmem:[%s244 + $0x2a8] sm:$0xff]
        %v400 = vld [vmem:[%s244 + $0x2b0] sm:$0xff]
        %v401 = vld [vmem:[%s244 + $0x2b8] sm:$0xff]
        %v402 = vld [vmem:[%s244 + $0x2c0] sm:$0xff]
        %v403 = vld [vmem:[%s244 + $0x2c8] sm:$0xff]
        %v404 = vld [vmem:[%s244 + $0x2d0] sm:$0xff]
        %v405 = vld [vmem:[%s244 + $0x2d8] sm:$0xff]
        %v406 = vld [vmem:[%s244 + $0x2e0] sm:$0xff]
        %v407 = vld [vmem:[%s244 + $0x2e8] sm:$0xff]
        %v408 = vld [vmem:[%s244 + $0x2f0] sm:$0xff]
        %v409 = vld [vmem:[%s244 + $0x2f8] sm:$0xff]
        %v410 = vld [vmem:[%s244 + $0x300] sm:$0xff]
        %v411 = vld [vmem:[%s244 + $0x308] sm:$0xff]
        %v412 = vld [vmem:[%s244 + $0x310] sm:$0xff]
        %v413 = vld [vmem:[%s244 + $0x318] sm:$0xff]
        %v414 = vld [vmem:[%s244 + $0x320] sm:$0xff]
        %v415 = vld [vmem:[%s244 + $0x328] sm:$0xff]
        %v416 = vld [vmem:[%s244 + $0x330] sm:$0xff]
        %v417 = vld [vmem:[%s244 + $0x338] sm:$0xff]
        %v418 = vld [vmem:[%s244 + $0x340] sm:$0xff]
        %v419 = vld [vmem:[%s244 + $0x348] sm:$0xff]
        %v420 = vld [vmem:[%s244 + $0x350] sm:$0xff]
        %v421 = vld [vmem:[%s244 + $0x358] sm:$0xff]
        %v422 = vld [vmem:[%s244 + $0x360] sm:$0xff]
        %v423 = vld [vmem:[%s244 + $0x368] sm:$0xff]
        %v424 = vld [vmem:[%s244 + $0x370] sm:$0xff]
        %v425 = vld [vmem:[%s244 + $0x378] sm:$0xff]
        %v426 = vld [vmem:[%s244 + $0x380] sm:$0xff]
        %v427 = vld [vmem:[%s244 + $0x388] sm:$0xff]
        %v428 = vld [vmem:[%s244 + $0x390] sm:$0xff]
        %v429 = vld [vmem:[%s244 + $0x398] sm:$0xff]
        %v430 = vld [vmem:[%s244 + $0x3a0] sm:$0xff]
        %v431 = vld [vmem:[%s244 + $0x3a8] sm:$0xff]
        %v432 = vld [vmem:[%s244 + $0x3b0] sm:$0xff]
        %v433 = vld [vmem:[%s244 + $0x3b8] sm:$0xff]
        %v434 = vld [vmem:[%s244 + $0x3c0] sm:$0xff]
        %v435 = vld [vmem:[%s244 + $0x3c8] sm:$0xff]
        %v436 = vld [vmem:[%s244 + $0x3d0] sm:$0xff]
        %v437 = vld [vmem:[%s244 + $0x3d8] sm:$0xff]
        %v438 = vld [vmem:[%s244 + $0x3e0] sm:$0xff]
        %v439 = vld [vmem:[%s244 + $0x3e8] sm:$0xff]
        %v440 = vld [vmem:[%s244 + $0x3f0] sm:$0xff]
        %v441 = vld [vmem:[%s244 + $0x3f8] sm:$0xff]
        %v446 = vunpack.c.l.b16 %v310
        %v447 = vunpack.c.h.b16 %v310
        %v448 = vunpack.c.l.b16 %v311
        %v449 = vunpack.c.h.b16 %v311
        %v450 = vunpack.c.l.b16 %v312
        %v451 = vunpack.c.h.b16 %v312
        %v452 = vunpack.c.l.b16 %v313
        %v453 = vunpack.c.h.b16 %v313
        %v454 = vpack.c.b16 %v450, %v446
        %v455 = vpack.c.b16 %v451, %v447
        %v456 = vpack.c.b16 %v452, %v448
        %v457 = vpack.c.b16 %v453, %v449
        %v590 = vunpack.c.l.b16 %v314
        %v591 = vunpack.c.h.b16 %v314
        %v592 = vunpack.c.l.b16 %v315
        %v593 = vunpack.c.h.b16 %v315
        %v594 = vunpack.c.l.b16 %v316
        %v595 = vunpack.c.h.b16 %v316
        %v596 = vunpack.c.l.b16 %v317
        %v597 = vunpack.c.h.b16 %v317
        %v598 = vunpack.c.l.b16 %v318
        %v599 = vunpack.c.h.b16 %v318
        %v600 = vunpack.c.l.b16 %v319
        %v601 = vunpack.c.h.b16 %v319
        %v602 = vunpack.c.l.b16 %v320
        %v603 = vunpack.c.h.b16 %v320
        %v604 = vunpack.c.l.b16 %v321
        %v605 = vunpack.c.h.b16 %v321
        %v606 = vunpack.c.l.b16 %v322
        %v607 = vunpack.c.h.b16 %v322
        %v608 = vunpack.c.l.b16 %v323
        %v609 = vunpack.c.h.b16 %v323
        %v610 = vunpack.c.l.b16 %v324
        %v611 = vunpack.c.h.b16 %v324
        %v612 = vunpack.c.l.b16 %v325
        %v613 = vunpack.c.h.b16 %v325
        %v614 = vunpack.c.l.b16 %v326
        %v615 = vunpack.c.h.b16 %v326
        %v616 = vunpack.c.l.b16 %v327
        %v617 = vunpack.c.h.b16 %v327
        %v618 = vunpack.c.l.b16 %v328
        %v619 = vunpack.c.h.b16 %v328
        %v620 = vunpack.c.l.b16 %v329
        %v621 = vunpack.c.h.b16 %v329
        %v622 = vunpack.c.l.b16 %v330
        %v623 = vunpack.c.h.b16 %v330
        %v624 = vunpack.c.l.b16 %v331
        %v625 = vunpack.c.h.b16 %v331
        %v626 = vunpack.c.l.b16 %v332
        %v627 = vunpack.c.h.b16 %v332
        %v628 = vunpack.c.l.b16 %v333
        %v629 = vunpack.c.h.b16 %v333
        %v630 = vunpack.c.l.b16 %v334
        %v631 = vunpack.c.h.b16 %v334
        %v632 = vunpack.c.l.b16 %v335
        %v633 = vunpack.c.h.b16 %v335
        %v634 = vunpack.c.l.b16 %v336
        %v635 = vunpack.c.h.b16 %v336
        %v636 = vunpack.c.l.b16 %v337
        %v637 = vunpack.c.h.b16 %v337
        %v638 = vunpack.c.l.b16 %v338
        %v639 = vunpack.c.h.b16 %v338
        %v640 = vunpack.c.l.b16 %v339
        %v641 = vunpack.c.h.b16 %v339
        %v642 = vunpack.c.l.b16 %v340
        %v643 = vunpack.c.h.b16 %v340
        %v644 = vunpack.c.l.b16 %v341
        %v645 = vunpack.c.h.b16 %v341
        %v646 = vunpack.c.l.b16 %v342
        %v647 = vunpack.c.h.b16 %v342
        %v648 = vunpack.c.l.b16 %v343
        %v649 = vunpack.c.h.b16 %v343
        %v650 = vunpack.c.l.b16 %v344
        %v651 = vunpack.c.h.b16 %v344
        %v652 = vunpack.c.l.b16 %v345
        %v653 = vunpack.c.h.b16 %v345
        %v654 = vunpack.c.l.b16 %v346
        %v655 = vunpack.c.h.b16 %v346
        %v656 = vunpack.c.l.b16 %v347
        %v657 = vunpack.c.h.b16 %v347
        %v658 = vunpack.c.l.b16 %v348
        %v659 = vunpack.c.h.b16 %v348
        %v660 = vunpack.c.l.b16 %v349
        %v661 = vunpack.c.h.b16 %v349
        %v662 = vunpack.c.l.b16 %v350
        %v663 = vunpack.c.h.b16 %v350
        %v664 = vunpack.c.l.b16 %v351
        %v665 = vunpack.c.h.b16 %v351
        %v666 = vunpack.c.l.b16 %v352
        %v667 = vunpack.c.h.b16 %v352
        %v668 = vunpack.c.l.b16 %v353
        %v669 = vunpack.c.h.b16 %v353
        %v670 = vunpack.c.l.b16 %v354
        %v671 = vunpack.c.h.b16 %v354
        %v672 = vunpack.c.l.b16 %v355
        %v673 = vunpack.c.h.b16 %v355
        %v674 = vunpack.c.l.b16 %v356
        %v675 = vunpack.c.h.b16 %v356
        %v676 = vunpack.c.l.b16 %v357
        %v677 = vunpack.c.h.b16 %v357
        %v678 = vunpack.c.l.b16 %v358
        %v679 = vunpack.c.h.b16 %v358
        %v680 = vunpack.c.l.b16 %v359
        %v681 = vunpack.c.h.b16 %v359
        %v682 = vunpack.c.l.b16 %v360
        %v683 = vunpack.c.h.b16 %v360
        %v684 = vunpack.c.l.b16 %v361
        %v685 = vunpack.c.h.b16 %v361
        %v686 = vunpack.c.l.b16 %v362
        %v687 = vunpack.c.h.b16 %v362
        %v688 = vunpack.c.l.b16 %v363
        %v689 = vunpack.c.h.b16 %v363
        %v690 = vunpack.c.l.b16 %v364
        %v691 = vunpack.c.h.b16 %v364
        %v692 = vunpack.c.l.b16 %v365
        %v693 = vunpack.c.h.b16 %v365
        %v694 = vunpack.c.l.b16 %v366
        %v695 = vunpack.c.h.b16 %v366
        %v696 = vunpack.c.l.b16 %v367
        %v697 = vunpack.c.h.b16 %v367
        %v698 = vunpack.c.l.b16 %v368
        %v699 = vunpack.c.h.b16 %v368
        %v700 = vunpack.c.l.b16 %v369
        %v701 = vunpack.c.h.b16 %v369
        %v702 = vunpack.c.l.b16 %v370
        %v703 = vunpack.c.h.b16 %v370
        %v704 = vunpack.c.l.b16 %v371
        %v705 = vunpack.c.h.b16 %v371
        %v706 = vunpack.c.l.b16 %v372
        %v707 = vunpack.c.h.b16 %v372
        %v708 = vunpack.c.l.b16 %v373
        %v709 = vunpack.c.h.b16 %v373
        %v710 = vunpack.c.l.b16 %v374
        %v711 = vunpack.c.h.b16 %v374
        %v712 = vunpack.c.l.b16 %v375
        %v713 = vunpack.c.h.b16 %v375
        %v714 = vunpack.c.l.b16 %v376
        %v715 = vunpack.c.h.b16 %v376
        %v716 = vunpack.c.l.b16 %v377
        %v717 = vunpack.c.h.b16 %v377
        %v718 = vunpack.c.l.b16 %v378
        %v719 = vunpack.c.h.b16 %v378
        %v720 = vunpack.c.l.b16 %v379
        %v721 = vunpack.c.h.b16 %v379
        %v722 = vunpack.c.l.b16 %v380
        %v723 = vunpack.c.h.b16 %v380
        %v724 = vunpack.c.l.b16 %v381
        %v725 = vunpack.c.h.b16 %v381
        %v726 = vunpack.c.l.b16 %v382
        %v727 = vunpack.c.h.b16 %v382
        %v728 = vunpack.c.l.b16 %v383
        %v729 = vunpack.c.h.b16 %v383
        %v730 = vunpack.c.l.b16 %v384
        %v731 = vunpack.c.h.b16 %v384
        %v732 = vunpack.c.l.b16 %v385
        %v733 = vunpack.c.h.b16 %v385
        %v734 = vunpack.c.l.b16 %v386
        %v735 = vunpack.c.h.b16 %v386
        %v736 = vunpack.c.l.b16 %v387
        %v737 = vunpack.c.h.b16 %v387
        %v738 = vunpack.c.l.b16 %v388
        %v739 = vunpack.c.h.b16 %v388
        %v740 = vunpack.c.l.b16 %v389
        %v741 = vunpack.c.h.b16 %v389
        %v742 = vunpack.c.l.b16 %v390
        %v743 = vunpack.c.h.b16 %v390
        %v744 = vunpack.c.l.b16 %v391
        %v745 = vunpack.c.h.b16 %v391
        %v746 = vunpack.c.l.b16 %v392
        %v747 = vunpack.c.h.b16 %v392
        %v748 = vunpack.c.l.b16 %v393
        %v749 = vunpack.c.h.b16 %v393
        %v750 = vunpack.c.l.b16 %v394
        %v751 = vunpack.c.h.b16 %v394
        %v752 = vunpack.c.l.b16 %v395
        %v753 = vunpack.c.h.b16 %v395
        %v754 = vunpack.c.l.b16 %v396
        %v755 = vunpack.c.h.b16 %v396
        %v756 = vunpack.c.l.b16 %v397
        %v757 = vunpack.c.h.b16 %v397
        %v758 = vunpack.c.l.b16 %v398
        %v759 = vunpack.c.h.b16 %v398
        %v760 = vunpack.c.l.b16 %v399
        %v761 = vunpack.c.h.b16 %v399
        %v762 = vunpack.c.l.b16 %v400
        %v763 = vunpack.c.h.b16 %v400
        %v764 = vunpack.c.l.b16 %v401
        %v765 = vunpack.c.h.b16 %v401
        %v766 = vunpack.c.l.b16 %v402
        %v767 = vunpack.c.h.b16 %v402
        %v768 = vunpack.c.l.b16 %v403
        %v769 = vunpack.c.h.b16 %v403
        %v770 = vunpack.c.l.b16 %v404
        %v771 = vunpack.c.h.b16 %v404
        %v772 = vunpack.c.l.b16 %v405
        %v773 = vunpack.c.h.b16 %v405
        %v774 = vunpack.c.l.b16 %v406
        %v775 = vunpack.c.h.b16 %v406
        %v776 = vunpack.c.l.b16 %v407
        %v777 = vunpack.c.h.b16 %v407
        %v778 = vunpack.c.l.b16 %v408
        %v779 = vunpack.c.h.b16 %v408
        %v780 = vunpack.c.l.b16 %v409
        %v781 = vunpack.c.h.b16 %v409
        %v782 = vunpack.c.l.b16 %v410
        %v783 = vunpack.c.h.b16 %v410
        %v784 = vunpack.c.l.b16 %v411
        %v785 = vunpack.c.h.b16 %v411
        %v786 = vunpack.c.l.b16 %v412
        %v787 = vunpack.c.h.b16 %v412
        %v788 = vunpack.c.l.b16 %v413
        %v789 = vunpack.c.h.b16 %v413
        %v790 = vunpack.c.l.b16 %v414
        %v791 = vunpack.c.h.b16 %v414
        %v792 = vunpack.c.l.b16 %v415
        %v793 = vunpack.c.h.b16 %v415
        %v794 = vunpack.c.l.b16 %v416
        %v795 = vunpack.c.h.b16 %v416
        %v796 = vunpack.c.l.b16 %v417
        %v797 = vunpack.c.h.b16 %v417
        %v798 = vunpack.c.l.b16 %v418
        %v799 = vunpack.c.h.b16 %v418
        %v800 = vunpack.c.l.b16 %v419
        %v801 = vunpack.c.h.b16 %v419
        %v802 = vunpack.c.l.b16 %v420
        %v803 = vunpack.c.h.b16 %v420
        %v804 = vunpack.c.l.b16 %v421
        %v805 = vunpack.c.h.b16 %v421
        %v806 = vunpack.c.l.b16 %v422
        %v807 = vunpack.c.h.b16 %v422
        %v808 = vunpack.c.l.b16 %v423
        %v809 = vunpack.c.h.b16 %v423
        %v810 = vunpack.c.l.b16 %v424
        %v811 = vunpack.c.h.b16 %v424
        %v812 = vunpack.c.l.b16 %v425
        %v813 = vunpack.c.h.b16 %v425
        %v814 = vunpack.c.l.b16 %v426
        %v815 = vunpack.c.h.b16 %v426
        %v816 = vunpack.c.l.b16 %v427
        %v817 = vunpack.c.h.b16 %v427
        %v818 = vunpack.c.l.b16 %v428
        %v819 = vunpack.c.h.b16 %v428
        %v820 = vunpack.c.l.b16 %v429
        %v821 = vunpack.c.h.b16 %v429
        %v822 = vunpack.c.l.b16 %v430
        %v823 = vunpack.c.h.b16 %v430
        %v824 = vunpack.c.l.b16 %v431
        %v825 = vunpack.c.h.b16 %v431
        %v826 = vunpack.c.l.b16 %v432
        %v827 = vunpack.c.h.b16 %v432
        %v828 = vunpack.c.l.b16 %v433
        %v829 = vunpack.c.h.b16 %v433
        %v830 = vunpack.c.l.b16 %v434
        %v831 = vunpack.c.h.b16 %v434
        %v832 = vunpack.c.l.b16 %v435
        %v833 = vunpack.c.h.b16 %v435
        %v834 = vunpack.c.l.b16 %v436
        %v835 = vunpack.c.h.b16 %v436
        %v836 = vunpack.c.l.b16 %v437
        %v837 = vunpack.c.h.b16 %v437
        %v838 = vunpack.c.l.b16 %v438
        %v839 = vunpack.c.h.b16 %v438
        %v840 = vunpack.c.l.b16 %v439
        %v841 = vunpack.c.h.b16 %v439
        %v842 = vunpack.c.l.b16 %v440
        %v843 = vunpack.c.h.b16 %v440
        %v844 = vunpack.c.l.b16 %v441
        %v845 = vunpack.c.h.b16 %v441
        %v846 = vpack.c.b16 %v594, %v590
        %v847 = vpack.c.b16 %v595, %v591
        %v848 = vpack.c.b16 %v596, %v592
        %v849 = vpack.c.b16 %v597, %v593
        %v850 = vpack.c.b16 %v602, %v598
        %v851 = vpack.c.b16 %v603, %v599
        %v852 = vpack.c.b16 %v604, %v600
        %v853 = vpack.c.b16 %v605, %v601
        %v854 = vpack.c.b16 %v610, %v606
        %v855 = vpack.c.b16 %v611, %v607
        %v856 = vpack.c.b16 %v612, %v608
        %v857 = vpack.c.b16 %v613, %v609
        %v858 = vpack.c.b16 %v618, %v614
        %v859 = vpack.c.b16 %v619, %v615
        %v860 = vpack.c.b16 %v620, %v616
        %v861 = vpack.c.b16 %v621, %v617
        %v862 = vpack.c.b16 %v626, %v622
        %v863 = vpack.c.b16 %v627, %v623
        %v864 = vpack.c.b16 %v628, %v624
        %v865 = vpack.c.b16 %v629, %v625
        %v866 = vpack.c.b16 %v634, %v630
        %v867 = vpack.c.b16 %v635, %v631
        %v868 = vpack.c.b16 %v636, %v632
        %v869 = vpack.c.b16 %v637, %v633
        %v870 = vpack.c.b16 %v642, %v638
        %v871 = vpack.c.b16 %v643, %v639
        %v872 = vpack.c.b16 %v644, %v640
        %v873 = vpack.c.b16 %v645, %v641
        %v874 = vpack.c.b16 %v650, %v646
        %v875 = vpack.c.b16 %v651, %v647
        %v876 = vpack.c.b16 %v652, %v648
        %v877 = vpack.c.b16 %v653, %v649
        %v878 = vpack.c.b16 %v658, %v654
        %v879 = vpack.c.b16 %v659, %v655
        %v880 = vpack.c.b16 %v660, %v656
        %v881 = vpack.c.b16 %v661, %v657
        %v882 = vpack.c.b16 %v666, %v662
        %v883 = vpack.c.b16 %v667, %v663
        %v884 = vpack.c.b16 %v668, %v664
        %v885 = vpack.c.b16 %v669, %v665
        %v886 = vpack.c.b16 %v674, %v670
        %v887 = vpack.c.b16 %v675, %v671
        %v888 = vpack.c.b16 %v676, %v672
        %v889 = vpack.c.b16 %v677, %v673
        %v890 = vpack.c.b16 %v682, %v678
        %v891 = vpack.c.b16 %v683, %v679
        %v892 = vpack.c.b16 %v684, %v680
        %v893 = vpack.c.b16 %v685, %v681
        %v894 = vpack.c.b16 %v690, %v686
        %v895 = vpack.c.b16 %v691, %v687
        %v896 = vpack.c.b16 %v692, %v688
        %v897 = vpack.c.b16 %v693, %v689
        %v898 = vpack.c.b16 %v698, %v694
        %v899 = vpack.c.b16 %v699, %v695
        %v900 = vpack.c.b16 %v700, %v696
        %v901 = vpack.c.b16 %v701, %v697
        %v902 = vpack.c.b16 %v706, %v702
        %v903 = vpack.c.b16 %v707, %v703
        %v904 = vpack.c.b16 %v708, %v704
        %v905 = vpack.c.b16 %v709, %v705
        %v906 = vpack.c.b16 %v714, %v710
        %v907 = vpack.c.b16 %v715, %v711
        %v908 = vpack.c.b16 %v716, %v712
        %v909 = vpack.c.b16 %v717, %v713
        %v910 = vpack.c.b16 %v722, %v718
        %v911 = vpack.c.b16 %v723, %v719
        %v912 = vpack.c.b16 %v724, %v720
        %v913 = vpack.c.b16 %v725, %v721
        %v914 = vpack.c.b16 %v730, %v726
        %v915 = vpack.c.b16 %v731, %v727
        %v916 = vpack.c.b16 %v732, %v728
        %v917 = vpack.c.b16 %v733, %v729
        %v918 = vpack.c.b16 %v738, %v734
        %v919 = vpack.c.b16 %v739, %v735
        %v920 = vpack.c.b16 %v740, %v736
        %v921 = vpack.c.b16 %v741, %v737
        %v922 = vpack.c.b16 %v746, %v742
        %v923 = vpack.c.b16 %v747, %v743
        %v924 = vpack.c.b16 %v748, %v744
        %v925 = vpack.c.b16 %v749, %v745
        %v926 = vpack.c.b16 %v754, %v750
        %v927 = vpack.c.b16 %v755, %v751
        %v928 = vpack.c.b16 %v756, %v752
        %v929 = vpack.c.b16 %v757, %v753
        %v930 = vpack.c.b16 %v762, %v758
        %v931 = vpack.c.b16 %v763, %v759
        %v932 = vpack.c.b16 %v764, %v760
        %v933 = vpack.c.b16 %v765, %v761
        %v934 = vpack.c.b16 %v770, %v766
        %v935 = vpack.c.b16 %v771, %v767
        %v936 = vpack.c.b16 %v772, %v768
        %v937 = vpack.c.b16 %v773, %v769
        %v938 = vpack.c.b16 %v778, %v774
        %v939 = vpack.c.b16 %v779, %v775
        %v940 = vpack.c.b16 %v780, %v776
        %v941 = vpack.c.b16 %v781, %v777
        %v942 = vpack.c.b16 %v786, %v782
        %v943 = vpack.c.b16 %v787, %v783
        %v944 = vpack.c.b16 %v788, %v784
        %v945 = vpack.c.b16 %v789, %v785
        %v946 = vpack.c.b16 %v794, %v790
        %v947 = vpack.c.b16 %v795, %v791
        %v948 = vpack.c.b16 %v796, %v792
        %v949 = vpack.c.b16 %v797, %v793
        %v950 = vpack.c.b16 %v802, %v798
        %v951 = vpack.c.b16 %v803, %v799
        %v952 = vpack.c.b16 %v804, %v800
        %v953 = vpack.c.b16 %v805, %v801
        %v954 = vpack.c.b16 %v810, %v806
        %v955 = vpack.c.b16 %v811, %v807
        %v956 = vpack.c.b16 %v812, %v808
        %v957 = vpack.c.b16 %v813, %v809
        %v958 = vpack.c.b16 %v818, %v814
        %v959 = vpack.c.b16 %v819, %v815
        %v960 = vpack.c.b16 %v820, %v816
        %v961 = vpack.c.b16 %v821, %v817
        %v962 = vpack.c.b16 %v826, %v822
        %v963 = vpack.c.b16 %v827, %v823
        %v964 = vpack.c.b16 %v828, %v824
        %v965 = vpack.c.b16 %v829, %v825
        %v966 = vpack.c.b16 %v834, %v830
        %v967 = vpack.c.b16 %v835, %v831
        %v968 = vpack.c.b16 %v836, %v832
        %v969 = vpack.c.b16 %v837, %v833
        %v970 = vpack.c.b16 %v842, %v838
        %v971 = vpack.c.b16 %v843, %v839
        %v972 = vpack.c.b16 %v844, %v840
        %v973 = vpack.c.b16 %v845, %v841
        %1102 = vmatpush.bf16.msra.mxu0 %v874
        %1103 = vmatpush.bf16.msra.mxu0 %v870
        %1104 = vmatpush.bf16.msra.mxu0 %v866
        %1105 = vmatpush.bf16.msra.mxu0 %v862
        %1106 = vmatpush.bf16.msra.mxu0 %v858
        %1107 = vmatpush.bf16.msra.mxu0 %v854
        %1108 = vmatpush.bf16.msra.mxu0 %v850
        %1109 = vmatpush.bf16.msra.mxu0 %v846
        %1110 = vmatmul.bf16.gmra.mxu0 %v454
        %v1111 = vpop.f32.mrf.mxu0
        %v1112 = vadd.f32 0.0, %v1111
        %v1113 = vpop.f32.mrf.mxu0
        %v1114 = vadd.f32 0.0, %v1113
        %1115 = vdwg.mxu0
        %1116 = vmatpush.bf16.msra.mxu0 %v906
        %1117 = vmatpush.bf16.msra.mxu0 %v902
        %1118 = vmatpush.bf16.msra.mxu0 %v898
        %1119 = vmatpush.bf16.msra.mxu0 %v894
        %1120 = vmatpush.bf16.msra.mxu0 %v890
        %1121 = vmatpush.bf16.msra.mxu0 %v886
        %1122 = vmatpush.bf16.msra.mxu0 %v882
        %1123 = vmatpush.bf16.msra.mxu0 %v878
        %1124 = vmatmul.bf16.gmra.mxu0 %v455
        %v1125 = vpop.f32.mrf.mxu0
        %v1126 = vadd.f32 %v1112, %v1125
        %v1127 = vpop.f32.mrf.mxu0
        %v1128 = vadd.f32 %v1114, %v1127
        %1129 = vdwg.mxu0
        %1130 = vmatpush.bf16.msra.mxu0 %v938
        %1131 = vmatpush.bf16.msra.mxu0 %v934
        %1132 = vmatpush.bf16.msra.mxu0 %v930
        %1133 = vmatpush.bf16.msra.mxu0 %v926
        %1134 = vmatpush.bf16.msra.mxu0 %v922
        %1135 = vmatpush.bf16.msra.mxu0 %v918
        %1136 = vmatpush.bf16.msra.mxu0 %v914
        %1137 = vmatpush.bf16.msra.mxu0 %v910
        %1138 = vmatmul.bf16.gmra.mxu0 %v456
        %v1139 = vpop.f32.mrf.mxu0
        %v1140 = vadd.f32 %v1126, %v1139
        %v1141 = vpop.f32.mrf.mxu0
        %v1142 = vadd.f32 %v1128, %v1141
        %1143 = vdwg.mxu0
        %1144 = vmatpush.bf16.msra.mxu0 %v970
        %1145 = vmatpush.bf16.msra.mxu0 %v966
        %1146 = vmatpush.bf16.msra.mxu0 %v962
        %1147 = vmatpush.bf16.msra.mxu0 %v958
        %1148 = vmatpush.bf16.msra.mxu0 %v954
        %1149 = vmatpush.bf16.msra.mxu0 %v950
        %1150 = vmatpush.bf16.msra.mxu0 %v946
        %1151 = vmatpush.bf16.msra.mxu0 %v942
        %1152 = vmatmul.bf16.gmra.mxu0 %v457
        %v1153 = vpop.f32.mrf.mxu0
        %v1154 = vadd.f32 %v1140, %v1153
        %v1155 = vpop.f32.mrf.mxu0
        %v1156 = vadd.f32 %v1142, %v1155
        %1157 = vdwg.mxu0
        %1158 = vmatpush.bf16.msra.mxu0 %v875
        %1159 = vmatpush.bf16.msra.mxu0 %v871
        %1160 = vmatpush.bf16.msra.mxu0 %v867
        %1161 = vmatpush.bf16.msra.mxu0 %v863
        %1162 = vmatpush.bf16.msra.mxu0 %v859
        %1163 = vmatpush.bf16.msra.mxu0 %v855
        %1164 = vmatpush.bf16.msra.mxu0 %v851
        %1165 = vmatpush.bf16.msra.mxu0 %v847
        %1166 = vmatmul.bf16.gmra.mxu0 %v454
        %v1167 = vpop.f32.mrf.mxu0
        %v1168 = vadd.f32 0.0, %v1167
        %v1169 = vpop.f32.mrf.mxu0
        %v1170 = vadd.f32 0.0, %v1169
        %1171 = vdwg.mxu0
        %1172 = vmatpush.bf16.msra.mxu0 %v907
        %1173 = vmatpush.bf16.msra.mxu0 %v903
        %1174 = vmatpush.bf16.msra.mxu0 %v899
        %1175 = vmatpush.bf16.msra.mxu0 %v895
        %1176 = vmatpush.bf16.msra.mxu0 %v891
        %1177 = vmatpush.bf16.msra.mxu0 %v887
        %1178 = vmatpush.bf16.msra.mxu0 %v883
        %1179 = vmatpush.bf16.msra.mxu0 %v879
        %1180 = vmatmul.bf16.gmra.mxu0 %v455
        %v1181 = vpop.f32.mrf.mxu0
        %v1182 = vadd.f32 %v1168, %v1181
        %v1183 = vpop.f32.mrf.mxu0
        %v1184 = vadd.f32 %v1170, %v1183
        %1185 = vdwg.mxu0
        %1186 = vmatpush.bf16.msra.mxu0 %v939
        %1187 = vmatpush.bf16.msra.mxu0 %v935
        %1188 = vmatpush.bf16.msra.mxu0 %v931
        %1189 = vmatpush.bf16.msra.mxu0 %v927
        %1190 = vmatpush.bf16.msra.mxu0 %v923
        %1191 = vmatpush.bf16.msra.mxu0 %v919
        %1192 = vmatpush.bf16.msra.mxu0 %v915
        %1193 = vmatpush.bf16.msra.mxu0 %v911
        %1194 = vmatmul.bf16.gmra.mxu0 %v456
        %v1195 = vpop.f32.mrf.mxu0
        %v1196 = vadd.f32 %v1182, %v1195
        %v1197 = vpop.f32.mrf.mxu0
        %v1198 = vadd.f32 %v1184, %v1197
        %1199 = vdwg.mxu0
        %1200 = vmatpush.bf16.msra.mxu0 %v971
        %1201 = vmatpush.bf16.msra.mxu0 %v967
        %1202 = vmatpush.bf16.msra.mxu0 %v963
        %1203 = vmatpush.bf16.msra.mxu0 %v959
        %1204 = vmatpush.bf16.msra.mxu0 %v955
        %1205 = vmatpush.bf16.msra.mxu0 %v951
        %1206 = vmatpush.bf16.msra.mxu0 %v947
        %1207 = vmatpush.bf16.msra.mxu0 %v943
        %1208 = vmatmul.bf16.gmra.mxu0 %v457
        %v1209 = vpop.f32.mrf.mxu0
        %v1210 = vadd.f32 %v1196, %v1209
        %v1211 = vpop.f32.mrf.mxu0
        %v1212 = vadd.f32 %v1198, %v1211
        %1213 = vdwg.mxu0
        %1214 = vmatpush.bf16.msra.mxu0 %v876
        %1215 = vmatpush.bf16.msra.mxu0 %v872
        %1216 = vmatpush.bf16.msra.mxu0 %v868
        %1217 = vmatpush.bf16.msra.mxu0 %v864
        %1218 = vmatpush.bf16.msra.mxu0 %v860
        %1219 = vmatpush.bf16.msra.mxu0 %v856
        %1220 = vmatpush.bf16.msra.mxu0 %v852
        %1221 = vmatpush.bf16.msra.mxu0 %v848
        %1222 = vmatmul.bf16.gmra.mxu0 %v454
        %v1223 = vpop.f32.mrf.mxu0
        %v1224 = vadd.f32 0.0, %v1223
        %v1225 = vpop.f32.mrf.mxu0
        %v1226 = vadd.f32 0.0, %v1225
        %1227 = vdwg.mxu0
        %1228 = vmatpush.bf16.msra.mxu0 %v908
        %1229 = vmatpush.bf16.msra.mxu0 %v904
        %1230 = vmatpush.bf16.msra.mxu0 %v900
        %1231 = vmatpush.bf16.msra.mxu0 %v896
        %1232 = vmatpush.bf16.msra.mxu0 %v892
        %1233 = vmatpush.bf16.msra.mxu0 %v888
        %1234 = vmatpush.bf16.msra.mxu0 %v884
        %1235 = vmatpush.bf16.msra.mxu0 %v880
        %1236 = vmatmul.bf16.gmra.mxu0 %v455
        %v1237 = vpop.f32.mrf.mxu0
        %v1238 = vadd.f32 %v1224, %v1237
        %v1239 = vpop.f32.mrf.mxu0
        %v1240 = vadd.f32 %v1226, %v1239
        %1241 = vdwg.mxu0
        %1242 = vmatpush.bf16.msra.mxu0 %v940
        %1243 = vmatpush.bf16.msra.mxu0 %v936
        %1244 = vmatpush.bf16.msra.mxu0 %v932
        %1245 = vmatpush.bf16.msra.mxu0 %v928
        %1246 = vmatpush.bf16.msra.mxu0 %v924
        %1247 = vmatpush.bf16.msra.mxu0 %v920
        %1248 = vmatpush.bf16.msra.mxu0 %v916
        %1249 = vmatpush.bf16.msra.mxu0 %v912
        %1250 = vmatmul.bf16.gmra.mxu0 %v456
        %v1251 = vpop.f32.mrf.mxu0
        %v1252 = vadd.f32 %v1238, %v1251
        %v1253 = vpop.f32.mrf.mxu0
        %v1254 = vadd.f32 %v1240, %v1253
        %1255 = vdwg.mxu0
        %1256 = vmatpush.bf16.msra.mxu0 %v972
        %1257 = vmatpush.bf16.msra.mxu0 %v968
        %1258 = vmatpush.bf16.msra.mxu0 %v964
        %1259 = vmatpush.bf16.msra.mxu0 %v960
        %1260 = vmatpush.bf16.msra.mxu0 %v956
        %1261 = vmatpush.bf16.msra.mxu0 %v952
        %1262 = vmatpush.bf16.msra.mxu0 %v948
        %1263 = vmatpush.bf16.msra.mxu0 %v944
        %1264 = vmatmul.bf16.gmra.mxu0 %v457
        %v1265 = vpop.f32.mrf.mxu0
        %v1266 = vadd.f32 %v1252, %v1265
        %v1267 = vpop.f32.mrf.mxu0
        %v1268 = vadd.f32 %v1254, %v1267
        %1269 = vdwg.mxu0
        %1270 = vmatpush.bf16.msra.mxu0 %v877
        %1271 = vmatpush.bf16.msra.mxu0 %v873
        %1272 = vmatpush.bf16.msra.mxu0 %v869
        %1273 = vmatpush.bf16.msra.mxu0 %v865
        %1274 = vmatpush.bf16.msra.mxu0 %v861
        %1275 = vmatpush.bf16.msra.mxu0 %v857
        %1276 = vmatpush.bf16.msra.mxu0 %v853
        %1277 = vmatpush.bf16.msra.mxu0 %v849
        %1278 = vmatmul.bf16.gmra.mxu0 %v454
        %v1279 = vpop.f32.mrf.mxu0
        %v1280 = vadd.f32 0.0, %v1279
        %v1281 = vpop.f32.mrf.mxu0
        %v1282 = vadd.f32 0.0, %v1281
        %1283 = vdwg.mxu0
        %1284 = vmatpush.bf16.msra.mxu0 %v909
        %1285 = vmatpush.bf16.msra.mxu0 %v905
        %1286 = vmatpush.bf16.msra.mxu0 %v901
        %1287 = vmatpush.bf16.msra.mxu0 %v897
        %1288 = vmatpush.bf16.msra.mxu0 %v893
        %1289 = vmatpush.bf16.msra.mxu0 %v889
        %1290 = vmatpush.bf16.msra.mxu0 %v885
        %1291 = vmatpush.bf16.msra.mxu0 %v881
        %1292 = vmatmul.bf16.gmra.mxu0 %v455
        %v1293 = vpop.f32.mrf.mxu0
        %v1294 = vadd.f32 %v1280, %v1293
        %v1295 = vpop.f32.mrf.mxu0
        %v1296 = vadd.f32 %v1282, %v1295
        %1297 = vdwg.mxu0
        %1298 = vmatpush.bf16.msra.mxu0 %v941
        %1299 = vmatpush.bf16.msra.mxu0 %v937
        %1300 = vmatpush.bf16.msra.mxu0 %v933
        %1301 = vmatpush.bf16.msra.mxu0 %v929
        %1302 = vmatpush.bf16.msra.mxu0 %v925
        %1303 = vmatpush.bf16.msra.mxu0 %v921
        %1304 = vmatpush.bf16.msra.mxu0 %v917
        %1305 = vmatpush.bf16.msra.mxu0 %v913
        %1306 = vmatmul.bf16.gmra.mxu0 %v456
        %v1307 = vpop.f32.mrf.mxu0
        %v1308 = vadd.f32 %v1294, %v1307
        %v1309 = vpop.f32.mrf.mxu0
        %v1310 = vadd.f32 %v1296, %v1309
        %1311 = vdwg.mxu0
        %1312 = vmatpush.bf16.msra.mxu0 %v973
        %1313 = vmatpush.bf16.msra.mxu0 %v969
        %1314 = vmatpush.bf16.msra.mxu0 %v965
        %1315 = vmatpush.bf16.msra.mxu0 %v961
        %1316 = vmatpush.bf16.msra.mxu0 %v957
        %1317 = vmatpush.bf16.msra.mxu0 %v953
        %1318 = vmatpush.bf16.msra.mxu0 %v949
        %1319 = vmatpush.bf16.msra.mxu0 %v945
        %1320 = vmatmul.bf16.gmra.mxu0 %v457
        %v1321 = vpop.f32.mrf.mxu0
        %v1322 = vadd.f32 %v1308, %v1321
        %v1323 = vpop.f32.mrf.mxu0
        %v1324 = vadd.f32 %v1310, %v1323
        %1325 = vdwg.mxu0
        %v1326 = vadd.f32 %v302, %v1154
        %v1327 = vadd.f32 %v303, %v1210
        %v1328 = vadd.f32 %v304, %v1266
        %v1329 = vadd.f32 %v305, %v1322
        %v1330 = vadd.f32 %v306, %v1156
        %v1331 = vadd.f32 %v307, %v1212
        %v1332 = vadd.f32 %v308, %v1268
        %v1333 = vadd.f32 %v309, %v1324
        %1334 = vst [vmem:[#allocation2] sm:$0xff] %v1326
        %1335 = vst [vmem:[#allocation2 + $0x8] sm:$0xff] %v1327
        %1336 = vst [vmem:[#allocation2 + $0x10] sm:$0xff] %v1328
        %1337 = vst [vmem:[#allocation2 + $0x18] sm:$0xff] %v1329
        %1338 = vst [vmem:[#allocation2 + $0x20] sm:$0xff] %v1330
        %1339 = vst [vmem:[#allocation2 + $0x28] sm:$0xff] %v1331
        %1340 = vst [vmem:[#allocation2 + $0x30] sm:$0xff] %v1332
        %1341 = vst [vmem:[#allocation2 + $0x38] sm:$0xff] %v1333
        // Predicated region
        $region49: #{tpu_custom_call.1} parent=31 // pred_check
          %p1342 = pneg %p290
        $region50: #{tpu_custom_call.1} parent=31 // pred_check_branch
          %1344 = sbr.rel (%p1342) target = $region52
        $region51: #{tpu_custom_call.1} parent=31 // pred_region
          %v1345 = vld [vmem:[#allocation2] sm:$0xff]
          %v1346 = vld [vmem:[#allocation2 + $0x8] sm:$0xff]
          %v1347 = vld [vmem:[#allocation2 + $0x10] sm:$0xff]
          %v1348 = vld [vmem:[#allocation2 + $0x18] sm:$0xff]
          %v1349 = vld [vmem:[#allocation2 + $0x20] sm:$0xff]
          %v1350 = vld [vmem:[#allocation2 + $0x28] sm:$0xff]
          %v1351 = vld [vmem:[#allocation2 + $0x30] sm:$0xff]
          %v1352 = vld [vmem:[#allocation2 + $0x38] sm:$0xff]
          %v1353 = vld [vmem:[%s254] sm:$0xf]
          %v1355 = vperm.slane %v1353, 0
          %v1356 = vperm.slane %v1353, 1
          %v1357 = vperm.slane %v1353, 2
          %v1358 = vperm.slane %v1353, 3
          %v1363 = vadd.f32 %v1345, %v1355
          %v1364 = vadd.f32 %v1346, %v1356
          %v1365 = vadd.f32 %v1347, %v1357
          %v1366 = vadd.f32 %v1348, %v1358
          %v1367 = vadd.f32 %v1349, %v1355
          %v1368 = vadd.f32 %v1350, %v1356
          %v1369 = vadd.f32 %v1351, %v1357
          %v1370 = vadd.f32 %v1352, %v1358
          %1371 = vst [vmem:[%s282] sm:$0xff] %v1363
          %1372 = vst [vmem:[%s282 + $0x8] sm:$0xff] %v1364
          %1373 = vst [vmem:[%s282 + $0x10] sm:$0xff] %v1365
          %1374 = vst [vmem:[%s282 + $0x18] sm:$0xff] %v1366
          %1375 = vst [vmem:[%s282 + $0x20] sm:$0xff] %v1367
          %1376 = vst [vmem:[%s282 + $0x28] sm:$0xff] %v1368
          %1377 = vst [vmem:[%s282 + $0x30] sm:$0xff] %v1369
          %1378 = vst [vmem:[%s282 + $0x38] sm:$0xff] %v1370
        $region52: #{tpu_custom_call.1} parent=31 // pred_fallthru
          _
        %s1379 = sand.u32 %s132, 1
        %s1380 = scalar_lea.sflag [#allocation5], %s1379
        %s1381 = sand.u32 %s132, 1
        %s1382 = smul.addr %s1381, 64
        %s1383 = scalar_lea.vmem [#allocation9], %s1382
        // Predicated region
        $region53: #{tpu_custom_call.1} parent=31 // pred_check
          %p1384 = pneg %p142
        $region54: #{tpu_custom_call.1} parent=31 // pred_check_branch
          %1386 = sbr.rel (%p1384) target = $region56
        $region55: #{tpu_custom_call.1} parent=31 // pred_region
          %s1387 = smul.u32 2, %s26
          %s1388 = smul.u32 4, %s27
          %1390 = vsyncadd %s1380, 0
          %s1391 = smul.addr %s1387, 16
          %s1392 = sadd.s32 %s1388, %s1391
          %s1393 = smul.addr %s1392, 8
          %s1394 = scalar_lea.hbm %s3, %s1393
          %s1395 = sshll.u32 %s1383, 4
          %s1396 = int_to_ptr.vmem [resolvable:$true] %s1395
          %s1397 = sshll.u32 %s1394, 4
          %s1398 = int_to_ptr.hbm [resolvable:$true] %s1397
          %1403 = dma.vmem_to_hbm [thread:$0]  %s1396, 1024, %s1398, %s1380, 512, 2048, 32
        $region56: #{tpu_custom_call.1} parent=31 // pred_fallthru
          _
      $region32: #{tpu_custom_call.1} parent=5 // pred_fallthru
        _
      %p1404 = scmp.le.s32.totalorder 2, %s16
      // Predicated region
      $region57: #{tpu_custom_call.1} parent=5 // pred_check
        %p1405 = pneg %p1404
      $region58: #{tpu_custom_call.1} parent=5 // pred_check_branch
        %1407 = sbr.rel (%p1405) target = $region60
      $region59: #{tpu_custom_call.1} parent=5 // pred_region
        %s1408 = ssub.s32 %s16, 2
        // Predicated region
        $region61: #{tpu_custom_call.1} parent=59 // pred_check
          %p1409 = pneg %p148
        $region62: #{tpu_custom_call.1} parent=59 // pred_check_branch
          %1411 = sbr.rel (%p1409) target = $region64
        $region63: #{tpu_custom_call.1} parent=59 // pred_region
          %s1412 = sand.u32 %s133, 1
          %s1413 = scalar_lea.sflag [#allocation5], %s1412
          %s1414 = sand.u32 %s133, 1
          %s1415 = smul.addr %s1414, 64
          %s1416 = scalar_lea.vmem [#allocation9], %s1415
          %1418 = dma.done %s1413, 1024
        $region64: #{tpu_custom_call.1} parent=59 // pred_fallthru
          _
      $region60: #{tpu_custom_call.1} parent=5 // pred_fallthru
        _
    $region6: #{tpu_custom_call.1} parent=1 // loop_footer
      %s20 = sadd.s32 1, %s16
    $region7: #{tpu_custom_call.1} parent=1 // loop_footer_branch
      %15 = sbr.rel target = $region3
    $region8: #{tpu_custom_call.1} parent=1 // loop_exit
      _
    %1419 = vsyncpa [#allocation4], 1
    %s1420 = scalar_lea.sflag [#allocation4], 1
    %1421 = vsyncpa %s1420, 1
    %1422 = vsyncpa [#allocation7], 1
    %s1423 = scalar_lea.sflag [#allocation7], 1
    %1424 = vsyncpa %s1423, 1
    %1425 = vsyncpa [#allocation5], 1
    %s1426 = scalar_lea.sflag [#allocation5], 1
    %1427 = vsyncpa %s1426, 1

</llo_original>
